<compile_context>
chip_gen: v5e
topology: v5e:2x2
jax: 0.10.0
libtpu: 0.0.40
codegen_flags: <defaults>
</compile_context>

<pallas_src>
import functools

import jax
import jax.numpy as jnp
import numpy as np
from jax.experimental import pallas as pl
from jax.experimental.pallas import tpu as pltpu


# ----------------------------- Pallas kernel ------------------------------


def _make_fused_bn_relu_conv_kernel(
    D, H, W, C, pads, dils, strides, ksize, Dout, Hout, Wout, Cout
):
    """Fused BN-affine + ReLU + zero-pad + dilated/strided/grouped 3D conv.

    Grid = (N, KD): outer axis = batch element ("parallel"), inner axis = depth tap kd
    ("arbitrary", accumulated into the resident output block).  Inside the kernel the channel
    axis is fused with W on the lane axis, and the KW taps are folded into a block-Toeplitz
    weight, so each (kd, kh) tap is one lane-dense MXU matmul over the full padded W row.
    """
    KD, KH, KW = ksize
    DD, DH, DW = dils
    SD, SH, SW = strides
    pd, ph, pw = pads
    Dp, Hp, Wp = D + 2 * pd, H + 2 * ph, W + 2 * pw
    M = Dout * Hout          # matmul M (output depth*height rows)
    K = Wp * C               # matmul K per (kd, kh) tap: full padded W row, all channels
    Nw = Wout * Cout         # matmul N (lane-dense output width)

    def _ds(start, size, stride):
        return pl.ds(start, size, stride) if stride > 1 else pl.ds(start, size)

    def kernel(x_ref, scale_ref, shift_ref, w_ref, o_ref, act_ref):
        # x_ref:     (D, H, W*C)              f32, one batch element (NDHWC, W*C fused)
        # scale_ref: (1, W*C)                 f32 BN scale, tiled across W
        # shift_ref: (1, W*C)                 f32 BN shift, tiled across W
        # w_ref:     (KH, Wp*C, Wout*Cout)    bf16 block-Toeplitz weight for depth tap kd
        # o_ref:     (Dout*Hout, Wout*Cout)   f32 resident output block (accumulator over kd)
        # act_ref:   (Dp, Hp, Wp*C)           bf16 scratch: zero-padded post-BN/ReLU act
        kd = pl.program_id(1)

        @pl.when(kd == 0)
        def _prepare():
            # Zero ONLY the padding halo (interior is fully overwritten below).  Guarded on
            # the tap axis, not program_id(0) == 0, so it also runs on the second TensorCore
            # when the "parallel" batch axis is megacore-split.
            if pd:
                z = jnp.zeros((pd, Hp, K), act_ref.dtype)
                act_ref[pl.ds(0, pd), :, :] = z
                act_ref[pl.ds(pd + D, pd), :, :] = z
            if ph:
                z = jnp.zeros((D, ph, K), act_ref.dtype)
                act_ref[pl.ds(pd, D), pl.ds(0, ph), :] = z
                act_ref[pl.ds(pd, D), pl.ds(ph + H, ph), :] = z
            if pw:
                z = jnp.zeros((D, H, pw * C), act_ref.dtype)
                act_ref[pl.ds(pd, D), pl.ds(ph, H), pl.ds(0, pw * C)] = z
                act_ref[pl.ds(pd, D), pl.ds(ph, H), pl.ds((pw + W) * C, pw * C)] = z
            # BN affine + ReLU in f32, stored bf16 into the interior of the padded scratch.
            act = jnp.maximum(x_ref[...] * scale_ref[...] + shift_ref[...], 0.0)
            act_ref[pl.ds(pd, D), pl.ds(ph, H), pl.ds(pw * C, W * C)] = act.astype(
                act_ref.dtype
            )

        # One lane-dense bf16 MXU matmul per kh tap: (M, Wp*C) x (Wp*C, Wout*Cout), f32 acc.
        # TODO(synk): when MXU-push bound, the KH slabs can be packed side by side into an
        # im2col VMEM scratch to raise K to KH*Wp*C in a single matmul per kd step.
        part = None
        for kh in range(KH):
            slab = act_ref[_ds(kd * DD, Dout, SD), _ds(kh * DH, Hout, SH), :]
            slab = slab.reshape(M, K)          # merge leading dims only; lane dim untouched
            contrib = jnp.dot(slab, w_ref[kh], preferred_element_type=jnp.float32)
            part = contrib if part is None else part + contrib

        @pl.when(kd == 0)
        def _first_tap():
            o_ref[...] = part

        @pl.when(kd > 0)
        def _accumulate():
            o_ref[...] += part

    return kernel


# ------------------------------ helpers ------------------------------------


def _vmem_tile_bytes(shape, dtype):
    """VMEM bytes of one buffer with the minor two dims rounded up to the hardware tile."""
    itemsize = jnp.dtype(dtype).itemsize
    sub = (8 * 4) // itemsize            # sublanes per tile: 8 (f32), 16 (bf16)
    dims = list(shape)
    dims[-1] = -(-dims[-1] // 128) * 128
    dims[-2] = -(-dims[-2] // sub) * sub
    n = 1
    for s in dims:
        n *= s
    return n * itemsize


# ------------------------------ Python wrapper ------------------------------


@functools.partial(
    jax.jit,
    static_argnames=("kernel_size", "stride", "dilation", "groups", "eps", "interpret"),
)
def dilated_conv3d_block(
    x_ncdhw,
    conv_w,   # (Cout, Cin//g, KD, KH, KW), PyTorch OIDHW layout
    gamma,    # (Cin,) BatchNorm weight
    beta,     # (Cin,) BatchNorm bias
    *,
    kernel_size=(3, 3, 3),
    stride=(1, 1, 1),
    dilation=(1, 1, 1),
    groups=1,
    eps=1e-5,
    interpret=False,
):
    N, C, D, H, W = x_ncdhw.shape
    Cout = conv_w.shape[0]
    KD, KH, KW = kernel_size
    DD, DH, DW = dilation
    if isinstance(stride, int):
        stride = (stride, stride, stride)
    SD, SH, SW = stride
    pads = tuple((k - 1) // 2 * d for k, d in zip(kernel_size, dilation))
    pd, ph, pw = pads
    G = groups
    Cin_g, Cout_g = C // G, Cout // G

    Dp, Hp, Wp = D + 2 * pd, H + 2 * ph, W + 2 * pw
    Dout = (Dp - DD * (KD - 1) - 1) // SD + 1
    Hout = (Hp - DH * (KH - 1) - 1) // SH + 1
    Wout = (Wp - DW * (KW - 1) - 1) // SW + 1

    # --- BatchNorm batch statistics (training mode), two-pass, directly on NCDHW ---
    mean = jnp.mean(x_ncdhw, axis=(0, 2, 3, 4))
    var = jnp.mean(jnp.square(x_ncdhw - mean[None, :, None, None, None]),
                   axis=(0, 2, 3, 4))
    scale = gamma * jax.lax.rsqrt(var + eps)
    shift = beta - mean * scale
    # TODO(synk): running_mean/running_var buffer updates (training-time side effect of
    # nn.BatchNorm3d) are not modeled; they do not affect the forward output.

    scale_wc = jnp.tile(scale, W).reshape(1, W * C).astype(jnp.float32)
    shift_wc = jnp.tile(shift, W).reshape(1, W * C).astype(jnp.float32)

    # TODO(synk): the NCDHW -> (N, D, H, W*C) relayout (and its inverse on the output) is an
    # extra HBM round trip around the kernel; keeping NDHWC end-to-end in the network (or
    # folding the packing into the kernel) would remove it.
    x_fused = jnp.transpose(x_ncdhw, (0, 2, 3, 4, 1)).reshape(N, D, H, W * C)

    # --- weight: (Cout, Cin_g, KD,KH,KW) -> block-Toeplitz (KD, KH, Wp*C, Wout*Cout) bf16 ---
    # Group block-diagonal over channels; the KW taps and the W stride are folded along the
    # padded-W axis so every (kd, kh) slab load takes the full lane dim (no lane-offset slice)
    # and the matmul directly produces the lane-dense (Dout*Hout, Wout*Cout) output layout.
    wg = jnp.transpose(conv_w, (2, 3, 4, 1, 0))                 # (KD, KH, KW, Cin_g, Cout)
    ci = jnp.arange(C)
    co = jnp.arange(Cout)
    grp_mask = (ci[:, None] // Cin_g == co[None, :] // Cout_g).astype(conv_w.dtype)
    wg_full = wg[:, :, :, ci % Cin_g, :] * grp_mask[None, None, None]   # (KD,KH,KW,C,Cout)
    wp_i = jnp.arange(Wp)
    ow_i = jnp.arange(Wout)
    kw_i = jnp.arange(KW)
    sel = (wp_i[None, :, None]
           == (ow_i[None, None, :] * SW + kw_i[:, None, None] * DW)).astype(conv_w.dtype)
    w_big = (
        jnp.einsum("kpw,dhkic->dhpiwc", sel, wg_full)
        .reshape(KD, KH, Wp * C, Wout * Cout)
        .astype(jnp.bfloat16)
    )
    # TODO(synk): for production DMFNet sizes (Cout>=128, large volumes) drop the Wout
    # spreading / dense group block-diagonal (weight & MXU FLOPs scale ~Wout*G via structural
    # zeros) and tile Dout/Hout/Wout with Cout on the lane axis instead.

    kernel = _make_fused_bn_relu_conv_kernel(
        D, H, W, C, pads, dilation, stride, kernel_size, Dout, Hout, Wout, Cout
    )

    if interpret:
        compiler_params = None
    else:
        try:
            info = pltpu.get_tpu_info()
            vmem_phys = int(getattr(info, "vmem_capacity_bytes", 64 * 2**20))
        except Exception:
            vmem_phys = 64 * 2**20
        vmem_cap = vmem_phys * 7 // 8        # leave headroom for compiler scratch
        vmem_need = (
            2 * _vmem_tile_bytes((D, H, W * C), jnp.float32)                  # x (2 bufs)
            + 4 * _vmem_tile_bytes((1, W * C), jnp.float32)                   # scale+shift
            + 2 * _vmem_tile_bytes((KH, Wp * C, Wout * Cout), jnp.bfloat16)   # per-kd weight
            + 2 * _vmem_tile_bytes((Dout * Hout, Wout * Cout), jnp.float32)   # output block
            + _vmem_tile_bytes((Dp, Hp, Wp * C), jnp.bfloat16)                # act scratch
        )
        compiler_params = pltpu.CompilerParams(
            dimension_semantics=("parallel", "arbitrary"),
            vmem_limit_bytes=int(min(vmem_cap, max(vmem_need + (8 << 20), 32 << 20))),
        )

    out = pl.pallas_call(
        kernel,
        out_shape=jax.ShapeDtypeStruct((N, Dout * Hout, Wout * Cout), jnp.float32),
        grid=(N, KD),
        in_specs=[
            pl.BlockSpec((None, D, H, W * C), lambda n, kd: (n, 0, 0, 0)),
            pl.BlockSpec((1, W * C), lambda n, kd: (0, 0)),
            pl.BlockSpec((1, W * C), lambda n, kd: (0, 0)),
            pl.BlockSpec((None, KH, Wp * C, Wout * Cout), lambda n, kd: (kd, 0, 0, 0)),
        ],
        out_specs=pl.BlockSpec((None, Dout * Hout, Wout * Cout), lambda n, kd: (n, 0, 0)),
        scratch_shapes=[pltpu.VMEM((Dp, Hp, Wp * C), jnp.bfloat16)],
        compiler_params=compiler_params,
        interpret=interpret,
    )(x_fused, scale_wc, shift_wc, w_big)

    # (N, Dout*Hout, Wout*Cout) -> NDHWC -> NCDHW
    out = out.reshape(N, Dout, Hout, Wout, Cout)
    return jnp.transpose(out, (0, 4, 1, 2, 3))


# ------------------------------- reference ----------------------------------


def _reference(x, conv_w, gamma, beta, kernel_size, stride, dilation, groups, eps=1e-5):
    mean = jnp.mean(x, axis=(0, 2, 3, 4), keepdims=True)
    var = jnp.mean((x - mean) ** 2, axis=(0, 2, 3, 4), keepdims=True)
    h = jnp.maximum(
        (x - mean) / jnp.sqrt(var + eps) * gamma[None, :, None, None, None]
        + beta[None, :, None, None, None], 0.0)
    pad = tuple((k - 1) // 2 * d for k, d in zip(kernel_size, dilation))
    if isinstance(stride, int):
        stride = (stride,) * 3
    return jax.lax.conv_general_dilated(
        h, conv_w,
        window_strides=stride,
        padding=[(p, p) for p in pad],
        rhs_dilation=dilation,
        feature_group_count=groups,
        dimension_numbers=("NCDHW", "OIDHW", "NCDHW"),
        precision=jax.lax.Precision.HIGHEST,
    )


# ----------------------------------- main -----------------------------------

if __name__ == "__main__":

    def run_case(case_key, *, num_in, num_out, kernel_size, dilation, stride, groups,
                 N, D, H, W, interpret):
        kx, kw = jax.random.split(case_key)
        x = jax.random.normal(kx, (N, num_in, D, H, W), dtype=jnp.float32)
        # Deterministic parameter init (shapes per the module's __init__):
        #   conv weight (Cout, Cin//g, KD, KH, KW), no bias ; BN: gamma=1, beta=0.
        fan_in = (num_in // groups) * int(np.prod(kernel_size))
        conv_w = jax.random.normal(
            kw, (num_out, num_in // groups) + kernel_size, dtype=jnp.float32
        ) * (1.0 / np.sqrt(fan_in))
        gamma = jnp.ones((num_in,), jnp.float32)
        beta = jnp.zeros((num_in,), jnp.float32)

        y = dilated_conv3d_block(
            x, conv_w, gamma, beta,
            kernel_size=kernel_size, stride=stride, dilation=dilation, groups=groups,
            interpret=interpret,
        )
        y = jax.block_until_ready(y)
        y_ref = _reference(x, conv_w, gamma, beta, kernel_size, stride, dilation, groups)
        # bf16 matmul inputs (f32 accumulate) -> looser tolerance vs. the f32 reference.
        np.testing.assert_allclose(np.asarray(y), np.asarray(y_ref), rtol=3e-2, atol=3e-2)

    key = jax.random.PRNGKey(0)
    k1, k2 = jax.random.split(key)

    # Main DMFNet config: grouped, dilated 3x3x3 conv with BN -- runs on the TPU.
    run_case(k1, num_in=8, num_out=16, kernel_size=(3, 3, 3), dilation=(2, 2, 2),
             stride=(1, 1, 1), groups=2, N=2, D=8, H=8, W=8, interpret=False)

    # Strided config (stride-2 encoder unit): validated in interpret mode so the strided
    # pl.ds slab loads and the strided weight-spreading math are exercised end to end.
    run_case(k2, num_in=8, num_out=16, kernel_size=(3, 3, 3), dilation=(1, 1, 1),
             stride=(2, 2, 2), groups=2, N=2, D=8, H=8, W=8, interpret=True)

    print("KERNEL_OK")
</pallas_src>

<mosaic_0001>
module attributes {stable_mosaic.version = 11 : i64} {
  func.func @kernel(%arg0: i32, %arg1: i32, %arg2: memref<1x8x8x64xf32, #tpu.memory_space<vmem>>, %arg3: memref<1x64xf32, #tpu.memory_space<vmem>>, %arg4: memref<1x64xf32, #tpu.memory_space<vmem>>, %arg5: memref<1x3x96x128xbf16, #tpu.memory_space<vmem>>, %arg6: memref<1x64x128xf32, #tpu.memory_space<vmem>>, %arg7: memref<12x12x96xbf16, #tpu.memory_space<vmem>>) attributes {dimension_semantics = [#tpu.dimension_semantics<parallel>, #tpu.dimension_semantics<arbitrary>], iteration_bounds = array<i64: 2, 3>, scalar_prefetch = 0 : i64, scratch_operands = 1 : i64, tpu.core_type = #tpu.core_type<tc>, window_params = [{transform_indices = @transform_0, window_bounds = array<i64: 1, 8, 8, 64>}, {pipeline_mode = #tpu.pipeline_mode<synchronous>, transform_indices = @transform_1, window_bounds = array<i64: 1, 64>}, {pipeline_mode = #tpu.pipeline_mode<synchronous>, transform_indices = @transform_2, window_bounds = array<i64: 1, 64>}, {transform_indices = @transform_3, window_bounds = array<i64: 1, 3, 96, 128>}, {transform_indices = @transform_4, window_bounds = array<i64: 1, 64, 128>}]} {
    %c0_i32 = arith.constant 0 : i32
    %0 = arith.cmpi eq, %arg1, %c0_i32 : i32
    %1 = arith.extui %0 : i1 to i32
    %c0_i32_0 = arith.constant 0 : i32
    %2 = arith.cmpi ne, %1, %c0_i32_0 : i32
    scf.if %2 {
      %cst_23 = arith.constant 0.000000e+00 : bf16
      %32 = vector.broadcast %cst_23 : bf16 to vector<2x12x96xbf16>
      %c0_24 = arith.constant 0 : index
      %c0_25 = arith.constant 0 : index
      %c0_26 = arith.constant 0 : index
      %33 = vector.load %arg7[%c0_24, %c0_25, %c0_26] : memref<12x12x96xbf16, #tpu.memory_space<vmem>>, vector<2x12x96xbf16>
      tpu.vector_store %arg7[%c0_24, %c0_25, %c0_26], %32 {strides = array<i32>} : memref<12x12x96xbf16, #tpu.memory_space<vmem>>, vector<2x12x96xbf16>,
      %c10 = arith.constant 10 : index
      %c0_27 = arith.constant 0 : index
      %c0_28 = arith.constant 0 : index
      %34 = vector.load %arg7[%c10, %c0_27, %c0_28] : memref<12x12x96xbf16, #tpu.memory_space<vmem>>, vector<2x12x96xbf16>
      tpu.vector_store %arg7[%c10, %c0_27, %c0_28], %32 {strides = array<i32>} : memref<12x12x96xbf16, #tpu.memory_space<vmem>>, vector<2x12x96xbf16>,
      %cst_29 = arith.constant 0.000000e+00 : bf16
      %35 = vector.broadcast %cst_29 : bf16 to vector<8x2x96xbf16>
      %c2_30 = arith.constant 2 : index
      %c0_31 = arith.constant 0 : index
      %c0_32 = arith.constant 0 : index
      %36 = vector.load %arg7[%c2_30, %c0_31, %c0_32] : memref<12x12x96xbf16, #tpu.memory_space<vmem>>, vector<8x2x96xbf16>
      tpu.vector_store %arg7[%c2_30, %c0_31, %c0_32], %35 {strides = array<i32>} : memref<12x12x96xbf16, #tpu.memory_space<vmem>>, vector<8x2x96xbf16>,
      %c2_33 = arith.constant 2 : index
      %c10_34 = arith.constant 10 : index
      %c0_35 = arith.constant 0 : index
      %37 = vector.load %arg7[%c2_33, %c10_34, %c0_35] : memref<12x12x96xbf16, #tpu.memory_space<vmem>>, vector<8x2x96xbf16>
      tpu.vector_store %arg7[%c2_33, %c10_34, %c0_35], %35 {strides = array<i32>} : memref<12x12x96xbf16, #tpu.memory_space<vmem>>, vector<8x2x96xbf16>,
      %cst_36 = arith.constant 0.000000e+00 : bf16
      %38 = vector.broadcast %cst_36 : bf16 to vector<8x8x16xbf16>
      %c2_37 = arith.constant 2 : index
      %c2_38 = arith.constant 2 : index
      %c0_39 = arith.constant 0 : index
      %39 = vector.load %arg7[%c2_37, %c2_38, %c0_39] : memref<12x12x96xbf16, #tpu.memory_space<vmem>>, vector<8x8x16xbf16>
      tpu.vector_store %arg7[%c2_37, %c2_38, %c0_39], %38 {strides = array<i32>} : memref<12x12x96xbf16, #tpu.memory_space<vmem>>, vector<8x8x16xbf16>,
      %c2_40 = arith.constant 2 : index
      %c2_41 = arith.constant 2 : index
      %c80 = arith.constant 80 : index
      %40 = vector.load %arg7[%c2_40, %c2_41, %c80] : memref<12x12x96xbf16, #tpu.memory_space<vmem>>, vector<8x8x16xbf16>
      tpu.vector_store %arg7[%c2_40, %c2_41, %c80], %38 {strides = array<i32>} : memref<12x12x96xbf16, #tpu.memory_space<vmem>>, vector<8x8x16xbf16>,
      %c0_42 = arith.constant 0 : index
      %c0_43 = arith.constant 0 : index
      %c0_44 = arith.constant 0 : index
      %c0_45 = arith.constant 0 : index
      %41 = vector.load %arg2[%c0_42, %c0_43, %c0_44, %c0_45] : memref<1x8x8x64xf32, #tpu.memory_space<vmem>>, vector<1x8x8x64xf32>
      %42 = vector.shape_cast %41 : vector<1x8x8x64xf32> to vector<8x8x64xf32>
      %c0_46 = arith.constant 0 : index
      %c0_47 = arith.constant 0 : index
      %43 = vector.load %arg3[%c0_46, %c0_47] : memref<1x64xf32, #tpu.memory_space<vmem>>, vector<1x64xf32>
      %44 = vector.shape_cast %43 : vector<1x64xf32> to vector<1x1x64xf32>
      %45 = vector.broadcast %44 : vector<1x1x64xf32> to vector<8x8x64xf32>
      %46 = arith.mulf %42, %45 : vector<8x8x64xf32>
      %c0_48 = arith.constant 0 : index
      %c0_49 = arith.constant 0 : index
      %47 = vector.load %arg4[%c0_48, %c0_49] : memref<1x64xf32, #tpu.memory_space<vmem>>, vector<1x64xf32>
      %48 = vector.shape_cast %47 : vector<1x64xf32> to vector<1x1x64xf32>
      %49 = vector.broadcast %48 : vector<1x1x64xf32> to vector<8x8x64xf32>
      %50 = arith.addf %46, %49 : vector<8x8x64xf32>
      %cst_50 = arith.constant 0.000000e+00 : f32
      %51 = vector.broadcast %cst_50 : f32 to vector<8x8x64xf32>
      %52 = arith.maximumf %50, %51 : vector<8x8x64xf32>
      %53 = arith.truncf %52 : vector<8x8x64xf32> to vector<8x8x64xbf16>
      %c2_51 = arith.constant 2 : index
      %c2_52 = arith.constant 2 : index
      %c16 = arith.constant 16 : index
      %54 = vector.load %arg7[%c2_51, %c2_52, %c16] : memref<12x12x96xbf16, #tpu.memory_space<vmem>>, vector<8x8x64xbf16>
      tpu.vector_store %arg7[%c2_51, %c2_52, %c16], %53 {strides = array<i32>} : memref<12x12x96xbf16, #tpu.memory_space<vmem>>, vector<8x8x64xbf16>,
    } else {
    }
    %c2_i32 = arith.constant 2 : i32
    %3 = arith.muli %arg1, %c2_i32 : i32
    %4 = arith.index_cast %3 : i32 to index
    %c0 = arith.constant 0 : index
    %c0_1 = arith.constant 0 : index
    %5 = vector.load %arg7[%4, %c0, %c0_1] : memref<12x12x96xbf16, #tpu.memory_space<vmem>>, vector<8x8x96xbf16>
    %6 = vector.shape_cast %5 : vector<8x8x96xbf16> to vector<64x96xbf16>
    %c0_2 = arith.constant 0 : index
    %c0_3 = arith.constant 0 : index
    %c0_4 = arith.constant 0 : index
    %c0_5 = arith.constant 0 : index
    %7 = vector.load %arg5[%c0_2, %c0_3, %c0_4, %c0_5] : memref<1x3x96x128xbf16, #tpu.memory_space<vmem>>, vector<1x1x96x128xbf16>
    %8 = vector.shape_cast %7 : vector<1x1x96x128xbf16> to vector<96x128xbf16>
    %cst = arith.constant dense<0.000000e+00> : vector<64x128xf32>
    %9 = tpu.matmul %6, %8, %cst {dimension_numbers = #tpu.dot_dimension_numbers<[1], [0], [0], [1], [0, 0, 1, 1], [], []>} : vector<64x96xbf16>, vector<96x128xbf16>, vector<64x128xf32> -> vector<64x128xf32>
    %c2_i32_6 = arith.constant 2 : i32
    %10 = arith.muli %arg1, %c2_i32_6 : i32
    %11 = arith.index_cast %10 : i32 to index
    %c2 = arith.constant 2 : index
    %c0_7 = arith.constant 0 : index
    %12 = vector.load %arg7[%11, %c2, %c0_7] : memref<12x12x96xbf16, #tpu.memory_space<vmem>>, vector<8x8x96xbf16>
    %13 = vector.shape_cast %12 : vector<8x8x96xbf16> to vector<64x96xbf16>
    %c0_8 = arith.constant 0 : index
    %c1 = arith.constant 1 : index
    %c0_9 = arith.constant 0 : index
    %c0_10 = arith.constant 0 : index
    %14 = vector.load %arg5[%c0_8, %c1, %c0_9, %c0_10] : memref<1x3x96x128xbf16, #tpu.memory_space<vmem>>, vector<1x1x96x128xbf16>
    %15 = vector.shape_cast %14 : vector<1x1x96x128xbf16> to vector<96x128xbf16>
    %cst_11 = arith.constant dense<0.000000e+00> : vector<64x128xf32>
    %16 = tpu.matmul %13, %15, %cst_11 {dimension_numbers = #tpu.dot_dimension_numbers<[1], [0], [0], [1], [0, 0, 1, 1], [], []>} : vector<64x96xbf16>, vector<96x128xbf16>, vector<64x128xf32> -> vector<64x128xf32>
    %17 = arith.addf %9, %16 : vector<64x128xf32>
    %c2_i32_12 = arith.constant 2 : i32
    %18 = arith.muli %arg1, %c2_i32_12 : i32
    %19 = arith.index_cast %18 : i32 to index
    %c4 = arith.constant 4 : index
    %c0_13 = arith.constant 0 : index
    %20 = vector.load %arg7[%19, %c4, %c0_13] : memref<12x12x96xbf16, #tpu.memory_space<vmem>>, vector<8x8x96xbf16>
    %21 = vector.shape_cast %20 : vector<8x8x96xbf16> to vector<64x96xbf16>
    %c0_14 = arith.constant 0 : index
    %c2_15 = arith.constant 2 : index
    %c0_16 = arith.constant 0 : index
    %c0_17 = arith.constant 0 : index
    %22 = vector.load %arg5[%c0_14, %c2_15, %c0_16, %c0_17] : memref<1x3x96x128xbf16, #tpu.memory_space<vmem>>, vector<1x1x96x128xbf16>
    %23 = vector.shape_cast %22 : vector<1x1x96x128xbf16> to vector<96x128xbf16>
    %cst_18 = arith.constant dense<0.000000e+00> : vector<64x128xf32>
    %24 = tpu.matmul %21, %23, %cst_18 {dimension_numbers = #tpu.dot_dimension_numbers<[1], [0], [0], [1], [0, 0, 1, 1], [], []>} : vector<64x96xbf16>, vector<96x128xbf16>, vector<64x128xf32> -> vector<64x128xf32>
    %25 = arith.addf %17, %24 : vector<64x128xf32>
    %c0_i32_19 = arith.constant 0 : i32
    %26 = arith.cmpi eq, %arg1, %c0_i32_19 : i32
    %27 = arith.extui %26 : i1 to i32
    %c0_i32_20 = arith.constant 0 : i32
    %28 = arith.cmpi ne, %27, %c0_i32_20 : i32
    scf.if %28 {
      %c0_23 = arith.constant 0 : index
      %c0_24 = arith.constant 0 : index
      %c0_25 = arith.constant 0 : index
      %32 = vector.load %arg6[%c0_23, %c0_24, %c0_25] : memref<1x64x128xf32, #tpu.memory_space<vmem>>, vector<1x64x128xf32>
      %33 = vector.shape_cast %32 : vector<1x64x128xf32> to vector<64x128xf32>
      %34 = vector.shape_cast %25 : vector<64x128xf32> to vector<1x64x128xf32>
      tpu.vector_store %arg6[%c0_23, %c0_24, %c0_25], %34 {strides = array<i32>} : memref<1x64x128xf32, #tpu.memory_space<vmem>>, vector<1x64x128xf32>,
    } else {
    }
    %c0_i32_21 = arith.constant 0 : i32
    %29 = arith.cmpi sgt, %arg1, %c0_i32_21 : i32
    %30 = arith.extui %29 : i1 to i32
    %c0_i32_22 = arith.constant 0 : i32
    %31 = arith.cmpi ne, %30, %c0_i32_22 : i32
    scf.if %31 {
      %c0_23 = arith.constant 0 : index
      %c0_24 = arith.constant 0 : index
      %c0_25 = arith.constant 0 : index
      %32 = vector.load %arg6[%c0_23, %c0_24, %c0_25] : memref<1x64x128xf32, #tpu.memory_space<vmem>>, vector<1x64x128xf32>
      %33 = vector.shape_cast %32 : vector<1x64x128xf32> to vector<64x128xf32>
      %34 = arith.addf %33, %25 : vector<64x128xf32>
      %c0_26 = arith.constant 0 : index
      %c0_27 = arith.constant 0 : index
      %c0_28 = arith.constant 0 : index
      %35 = vector.load %arg6[%c0_26, %c0_27, %c0_28] : memref<1x64x128xf32, #tpu.memory_space<vmem>>, vector<1x64x128xf32>
      %36 = vector.shape_cast %35 : vector<1x64x128xf32> to vector<64x128xf32>
      %37 = vector.shape_cast %34 : vector<64x128xf32> to vector<1x64x128xf32>
      tpu.vector_store %arg6[%c0_26, %c0_27, %c0_28], %37 {strides = array<i32>} : memref<1x64x128xf32, #tpu.memory_space<vmem>>, vector<1x64x128xf32>,
    } else {
    }
    return
  }
  func.func @transform_0(%arg0: i32, %arg1: i32) -> (i32, i32, i32, i32) {
    %c0_i32 = arith.constant 0 : i32
    %c0_i32_0 = arith.constant 0 : i32
    %c0_i32_1 = arith.constant 0 : i32
    %c0_i32_2 = arith.constant 0 : i32
    return %arg0, %c0_i32, %c0_i32_0, %c0_i32_1 : i32, i32, i32, i32
  }
  func.func @transform_1(%arg0: i32, %arg1: i32) -> (i32, i32) {
    %c0_i32 = arith.constant 0 : i32
    %c0_i32_0 = arith.constant 0 : i32
    %c0_i32_1 = arith.constant 0 : i32
    return %c0_i32, %c0_i32_0 : i32, i32
  }
  func.func @transform_2(%arg0: i32, %arg1: i32) -> (i32, i32) {
    %c0_i32 = arith.constant 0 : i32
    %c0_i32_0 = arith.constant 0 : i32
    %c0_i32_1 = arith.constant 0 : i32
    return %c0_i32, %c0_i32_0 : i32, i32
  }
  func.func @transform_3(%arg0: i32, %arg1: i32) -> (i32, i32, i32, i32) {
    %c0_i32 = arith.constant 0 : i32
    %c0_i32_0 = arith.constant 0 : i32
    %c0_i32_1 = arith.constant 0 : i32
    %c0_i32_2 = arith.constant 0 : i32
    return %arg1, %c0_i32, %c0_i32_0, %c0_i32_1 : i32, i32, i32, i32
  }
  func.func @transform_4(%arg0: i32, %arg1: i32) -> (i32, i32, i32) {
    %c0_i32 = arith.constant 0 : i32
    %c0_i32_0 = arith.constant 0 : i32
    %c0_i32_1 = arith.constant 0 : i32
    return %arg0, %c0_i32, %c0_i32_0 : i32, i32, i32
  }
}

</mosaic_0001>

<llo_original>
// kernel: tile.13
$region0: #{tile.13}
  #allocation0 [shape = 's32[1]{0}', space=sflag, size = 0x4, scoped, tag = 'scoped memory for tile.13']
  %s0 = inlined_call_operand.vmem [shape: f32[8], index: 0, kind: input, shape index: {}]
  %s1 = inlined_call_operand.vmem [shape: f32[8,8], index: 1, kind: output, shape index: {}]
  // Predicated region
  $region2: #{tile.13} parent=0 // pred_check
    _
  $region3: #{tile.13} parent=0 // pred_check_branch
    %3 = sbr.rel (0) target = $region5
  $region4: #{tile.13} parent=0 // pred_region
    _
  $region5: #{tile.13} parent=0 // pred_fallthru
    _
  %v4 = vld [vmem:[%s0] ss:$0 sm:$0xff]
  %5 = vst [vmem:[%s1] sm:$0xff] %v4

// kernel: tile.14
$region0: #{tile.14}
  %s0 = inlined_call_operand.vmem [shape: f32[8,8], index: 0, kind: input, shape index: {}]
  %s1 = inlined_call_operand.vmem [shape: f32[1,64], index: 1, kind: output, shape index: {}]
  $region1: #{tile.14} parent=0
    #allocation0 [shape = 'u8[4096]{0}', space=vmem, size = 0x1000, scoped, tag = 'scoped mem for output reshape']
    %v2 = vld [vmem:[%s0] sm:$0x1]
    %vm3 = vcmask 64512
    %4 = vst.msk [vmem:[#allocation0] sm:$0x1] %vm3, %v2
    %s5 = scalar_lea.vmem %s0, 7
    %v6 = vld [vmem:[%s5] sm:$0x1]
    %7 = vrot.lane.b32.xlu0 %v6, 56
    %v8 = vpop.permute.xlu0 %7
    %vm9 = vcmask 523712
    %10 = vst.msk [vmem:[#allocation0] sm:$0x1] %vm9, %v8
    %s11 = scalar_lea.vmem %s0, 6
    %v12 = vld [vmem:[%s11] sm:$0x1]
    %13 = vrot.lane.b32.xlu0 %v12, 48
    %v14 = vpop.permute.xlu0 %13
    %vm15 = vcmask 458112
    %16 = vst.msk [vmem:[#allocation0] sm:$0x1] %vm15, %v14
    %s17 = scalar_lea.vmem %s0, 5
    %v18 = vld [vmem:[%s17] sm:$0x1]
    %19 = vrot.lane.b32.xlu0 %v18, 40
    %v20 = vpop.permute.xlu0 %19
    %vm21 = vcmask 392512
    %22 = vst.msk [vmem:[#allocation0] sm:$0x1] %vm21, %v20
    %s23 = scalar_lea.vmem %s0, 4
    %v24 = vld [vmem:[%s23] sm:$0x1]
    %25 = vrot.lane.b32.xlu0 %v24, 32
    %v26 = vpop.permute.xlu0 %25
    %vm27 = vcmask 326912
    %28 = vst.msk [vmem:[#allocation0] sm:$0x1] %vm27, %v26
    %s29 = scalar_lea.vmem %s0, 3
    %v30 = vld [vmem:[%s29] sm:$0x1]
    %31 = vrot.lane.b32.xlu0 %v30, 24
    %v32 = vpop.permute.xlu0 %31
    %vm33 = vcmask 261312
    %34 = vst.msk [vmem:[#allocation0] sm:$0x1] %vm33, %v32
    %s35 = scalar_lea.vmem %s0, 2
    %v36 = vld [vmem:[%s35] sm:$0x1]
    %37 = vrot.lane.b32.xlu0 %v36, 16
    %v38 = vpop.permute.xlu0 %37
    %vm39 = vcmask 195712
    %40 = vst.msk [vmem:[#allocation0] sm:$0x1] %vm39, %v38
    %s41 = scalar_lea.vmem %s0, 1
    %v42 = vld [vmem:[%s41] sm:$0x1]
    %43 = vrot.lane.b32.xlu0 %v42, 8
    %v44 = vpop.permute.xlu0 %43
    %vm45 = vcmask 130112
    %46 = vst.msk [vmem:[#allocation0] sm:$0x1] %vm45, %v44
    %s48 = ssub.s32 2, 1
    %v49 = vld [vmem:[#allocation0] sm:%s48]
    %s51 = ssub.s32 2, 1
    %52 = vst [vmem:[%s1] sm:%s51] %v49

// kernel: dilated_conv3d_block.1
$region0: #{dilated_conv3d_block.1}
  #allocation0 [shape = 'u32[]', space=smem, size = 0x4, offset = 0x4, fixed_abs, tag = 'smem constant byte address 0x4 - core index']
  #allocation1 [shape = 'u32[72,128]{1,0:T(1,128)}', space=vmem, size = 0x9000, scoped, tag = 'internal scratch']
  #allocation2 [shape = 'bf16[12,12,96]{2,1,0:T(8,128)(2,1)}', space=vmem, size = 0xc000, scoped, tag = 'scratch operand']
  %s0 = inlined_call_operand.vmem [shape: f32[2,8,8,64], index: 0, kind: input, shape index: {}]
  %s1 = inlined_call_operand.vmem [shape: f32[1,64], index: 1, kind: input, shape index: {}]
  %s2 = inlined_call_operand.vmem [shape: f32[1,64], index: 2, kind: input, shape index: {}]
  %s3 = inlined_call_operand.vmem [shape: bf16[3,3,96,128], index: 3, kind: input, shape index: {}]
  %s4 = inlined_call_operand.vmem [shape: f32[2,64,128], index: 4, kind: output, shape index: {}]
  %s5 = sld [smem:[#allocation0]]
  $region61: #{dilated_conv3d_block.1} parent=0
    _
  %s7 = ssub.s32 1, %s5
  %s8 = scalar_select 0, %s7, %s5
  loop: start=0, step=1, limit=8
  $region2: #{dilated_conv3d_block.1} parent=0 // loop_pre_header
    _
  $region3: #{dilated_conv3d_block.1} parent=0 // loop_header
    %s10 = sphi 0, %s14
    %p11 = scmp.ge.s32.totalorder %s10, 8
    %s17 = sphi 0, %s29
    %s18 = sphi 0, %s25
    %s19 = sphi 0, %s17
    %s20 = sphi 0, %s18
    %s21 = sphi 0, %s19
    %s22 = sphi 0, %s20
    %s32 = sphi 0, %s34
    %s35 = sphi 0, %s32
    %s36 = sphi 0, %s35
    %s52 = sphi 0, %s36
    %s56 = sphi 0, %s56
    %s58 = sphi 0, %s56
    %s59 = sphi 0, %s58
    %s73 = sphi 0, %s59
    %s77 = sphi 0, %s77
    %s79 = sphi 0, %s77
    %s80 = sphi 0, %s79
    %s94 = sphi 0, %s80
    %s100 = sphi 0, %s102
    %s103 = sphi 0, %s100
    %s104 = sphi 0, %s103
    %s120 = sphi 0, %s104
    %s126 = sphi 0, %s128
    %s129 = sphi 0, %s126
    %s130 = sphi 0, %s129
    %s146 = sphi 0, %s130
  $region4: #{dilated_conv3d_block.1} parent=0 // loop_header_branch
    %13 = sbr.rel (%p11) target = $region8
  $region5: #{dilated_conv3d_block.1} parent=0 // loop_body
    %s15 = ssub.s32 %s10, 1
    %s16 = ssub.s32 %s10, 2
    %s23 = sadd.s32 1, %s18
    %p24 = scmp.ge.s32.totalorder %s23, 3
    %s25 = scalar_select %p24, 0, %s23
    %s26 = sadd.s32 1, %s17
    %s27 = scalar_select %p24, %s26, %s17
    %p28 = scmp.ge.s32.totalorder %s27, 2
    %s29 = scalar_select %p28, 0, %s27
    %s30 = ssub.s32 %s17, %s29
    %p31 = scmp.eq.s32.totalorder %s30, 0
    %s33 = sadd.s32 %s32, 1
    %s34 = scalar_select %p31, %s32, %s33
    %p37 = pneg %p31
    %p38 = scmp.eq.s32.totalorder %s10, 5
    %p39 = por %p37, %p38
    %p40 = scmp.ne.s32.totalorder %s32, %s35
    %p41 = scmp.eq.s32.totalorder %s10, 0
    %p42 = por %p40, %p41
    %p43 = scmp.ne.s32.totalorder %s32, %s35
    %p44 = scmp.eq.s32.totalorder %s15, 5
    %p45 = por %p43, %p44
    %p46 = scmp.ne.s32.totalorder %s35, %s36
    %p47 = scmp.eq.s32.totalorder %s15, 0
    %p48 = por %p46, %p47
    %p49 = scmp.ne.s32.totalorder %s35, %s36
    %p50 = scmp.eq.s32.totalorder %s16, 5
    %p51 = por %p49, %p50
    %p53 = scmp.ne.s32.totalorder %s36, %s52
    %p54 = scmp.eq.s32.totalorder %s16, 0
    %p55 = por %p53, %p54
    %s57 = sadd.s32 %s56, 1
    %p60 = scmp.eq.s32.totalorder %s10, 5
    %p61 = scmp.ne.s32.totalorder %s56, %s58
    %p62 = scmp.eq.s32.totalorder %s10, 0
    %p63 = por %p61, %p62
    %p64 = scmp.ne.s32.totalorder %s56, %s58
    %p65 = scmp.eq.s32.totalorder %s15, 5
    %p66 = por %p64, %p65
    %p67 = scmp.ne.s32.totalorder %s58, %s59
    %p68 = scmp.eq.s32.totalorder %s15, 0
    %p69 = por %p67, %p68
    %p70 = scmp.ne.s32.totalorder %s58, %s59
    %p71 = scmp.eq.s32.totalorder %s16, 5
    %p72 = por %p70, %p71
    %p74 = scmp.ne.s32.totalorder %s59, %s73
    %p75 = scmp.eq.s32.totalorder %s16, 0
    %p76 = por %p74, %p75
    %s78 = sadd.s32 %s77, 1
    %p81 = scmp.eq.s32.totalorder %s10, 5
    %p82 = scmp.ne.s32.totalorder %s77, %s79
    %p83 = scmp.eq.s32.totalorder %s10, 0
    %p84 = por %p82, %p83
    %p85 = scmp.ne.s32.totalorder %s77, %s79
    %p86 = scmp.eq.s32.totalorder %s15, 5
    %p87 = por %p85, %p86
    %p88 = scmp.ne.s32.totalorder %s79, %s80
    %p89 = scmp.eq.s32.totalorder %s15, 0
    %p90 = por %p88, %p89
    %p91 = scmp.ne.s32.totalorder %s79, %s80
    %p92 = scmp.eq.s32.totalorder %s16, 5
    %p93 = por %p91, %p92
    %p95 = scmp.ne.s32.totalorder %s80, %s94
    %p96 = scmp.eq.s32.totalorder %s16, 0
    %p97 = por %p95, %p96
    %s98 = ssub.s32 %s18, %s25
    %p99 = scmp.eq.s32.totalorder %s98, 0
    %s101 = sadd.s32 %s100, 1
    %s102 = scalar_select %p99, %s100, %s101
    %p105 = pneg %p99
    %p106 = scmp.eq.s32.totalorder %s10, 5
    %p107 = por %p105, %p106
    %p108 = scmp.ne.s32.totalorder %s100, %s103
    %p109 = scmp.eq.s32.totalorder %s10, 0
    %p110 = por %p108, %p109
    %p111 = scmp.ne.s32.totalorder %s100, %s103
    %p112 = scmp.eq.s32.totalorder %s15, 5
    %p113 = por %p111, %p112
    %p114 = scmp.ne.s32.totalorder %s103, %s104
    %p115 = scmp.eq.s32.totalorder %s15, 0
    %p116 = por %p114, %p115
    %p117 = scmp.ne.s32.totalorder %s103, %s104
    %p118 = scmp.eq.s32.totalorder %s16, 5
    %p119 = por %p117, %p118
    %p121 = scmp.ne.s32.totalorder %s104, %s120
    %p122 = scmp.eq.s32.totalorder %s16, 0
    %p123 = por %p121, %p122
    %s124 = ssub.s32 %s17, %s29
    %p125 = scmp.eq.s32.totalorder %s124, 0
    %s127 = sadd.s32 %s126, 1
    %s128 = scalar_select %p125, %s126, %s127
    %p131 = pneg %p125
    %p132 = scmp.eq.s32.totalorder %s10, 5
    %p133 = por %p131, %p132
    %p134 = scmp.ne.s32.totalorder %s126, %s129
    %p135 = scmp.eq.s32.totalorder %s10, 0
    %p136 = por %p134, %p135
    %p137 = scmp.ne.s32.totalorder %s126, %s129
    %p138 = scmp.eq.s32.totalorder %s15, 5
    %p139 = por %p137, %p138
    %p140 = scmp.ne.s32.totalorder %s129, %s130
    %p141 = scmp.eq.s32.totalorder %s15, 0
    %p142 = por %p140, %p141
    %p143 = scmp.ne.s32.totalorder %s129, %s130
    %p144 = scmp.eq.s32.totalorder %s16, 5
    %p145 = por %p143, %p144
    %p147 = scmp.ne.s32.totalorder %s130, %s146
    %p148 = scmp.eq.s32.totalorder %s16, 0
    %p149 = por %p147, %p148
    %p150 = scmp.le.s32.totalorder 1, %s10
    %p151 = scmp.lt.s32.totalorder %s10, 7
    %p152 = pnand %p150, %p151
    %p153 = pneg %p152
    // Predicated region
    $region9: #{dilated_conv3d_block.1} parent=5 // pred_check
      _
    $region10: #{dilated_conv3d_block.1} parent=5 // pred_check_branch
      %155 = sbr.rel (%p152) target = $region12
    $region11: #{dilated_conv3d_block.1} parent=5 // pred_region
      %s156 = ssub.s32 %s10, 1
      // Predicated region
      $region13: #{dilated_conv3d_block.1} parent=11 // pred_check
        %p157 = pneg %p69
      $region14: #{dilated_conv3d_block.1} parent=11 // pred_check_branch
        %159 = sbr.rel (%p157) target = $region16
      $region15: #{dilated_conv3d_block.1} parent=11 // pred_region
        _
      $region16: #{dilated_conv3d_block.1} parent=11 // pred_fallthru
        _
      // Predicated region
      $region17: #{dilated_conv3d_block.1} parent=11 // pred_check
        %p160 = pneg %p90
      $region18: #{dilated_conv3d_block.1} parent=11 // pred_check_branch
        %162 = sbr.rel (%p160) target = $region20
      $region19: #{dilated_conv3d_block.1} parent=11 // pred_region
        _
      $region20: #{dilated_conv3d_block.1} parent=11 // pred_fallthru
        _
    $region12: #{dilated_conv3d_block.1} parent=5 // pred_fallthru
      _
    %p163 = scmp.lt.s32.totalorder %s10, 6
    // Predicated region
    $region21: #{dilated_conv3d_block.1} parent=5 // pred_check
      %p164 = pneg %p163
    $region22: #{dilated_conv3d_block.1} parent=5 // pred_check_branch
      %166 = sbr.rel (%p164) target = $region24
    $region23: #{dilated_conv3d_block.1} parent=5 // pred_region
      // Predicated region
      $region25: #{dilated_conv3d_block.1} parent=23 // pred_check
        %p167 = pneg %p42
      $region26: #{dilated_conv3d_block.1} parent=23 // pred_check_branch
        %169 = sbr.rel (%p167) target = $region28
      $region27: #{dilated_conv3d_block.1} parent=23 // pred_region
        %p170 = scmp.lt.s32.totalorder %s17, 1
        %s171 = scalar_select %p170, %s17, 1
        %s172 = smul.addr %s171, 8
        %s173 = smul.addr %s172, 8
        %s174 = scalar_lea.vmem %s0, %s173
      $region28: #{dilated_conv3d_block.1} parent=23 // pred_fallthru
        _
      // Predicated region
      $region29: #{dilated_conv3d_block.1} parent=23 // pred_check
        %p175 = pneg %p110
      $region30: #{dilated_conv3d_block.1} parent=23 // pred_check_branch
        %177 = sbr.rel (%p175) target = $region32
      $region31: #{dilated_conv3d_block.1} parent=23 // pred_region
        %p178 = scmp.lt.s32.totalorder %s18, 2
        %s179 = scalar_select %p178, %s18, 2
        %s180 = smul.addr %s179, 36
        %s181 = smul.addr %s180, 4
        %s182 = scalar_lea.vmem %s3, %s181
      $region32: #{dilated_conv3d_block.1} parent=23 // pred_fallthru
        _
    $region24: #{dilated_conv3d_block.1} parent=5 // pred_fallthru
      _
    %p183 = scmp.le.s32.totalorder 1, %s10
    %p184 = scmp.lt.s32.totalorder %s10, 7
    %p185 = pnand %p183, %p184
    %p186 = pneg %p185
    // Predicated region
    $region33: #{dilated_conv3d_block.1} parent=5 // pred_check
      _
    $region34: #{dilated_conv3d_block.1} parent=5 // pred_check_branch
      %188 = sbr.rel (%p185) target = $region36
    $region35: #{dilated_conv3d_block.1} parent=5 // pred_region
      %s189 = ssub.s32 %s10, 1
      %p190 = scmp.lt.s32.totalorder %s19, 1
      %s191 = scalar_select %p190, %s19, 1
      %s192 = smul.addr %s191, 8
      %s193 = smul.addr %s192, 8
      %s194 = scalar_lea.vmem %s0, %s193
      %p195 = pneg %p48
      %p196 = pneg %p45
      %p197 = pneg %p69
      %p198 = pneg %p66
      %p199 = pneg %p90
      %p200 = pneg %p87
      %p201 = scmp.lt.s32.totalorder %s20, 2
      %s202 = scalar_select %p201, %s20, 2
      %s203 = smul.addr %s202, 36
      %s204 = smul.addr %s203, 4
      %s205 = scalar_lea.vmem %s3, %s204
      %p206 = pneg %p116
      %p207 = pneg %p113
      %p208 = pneg %p142
      %p209 = pneg %p139
      %p210 = scmp.lt.s32.totalorder %s19, 1
      %s211 = scalar_select %p210, %s19, 1
      %s212 = smul.addr %s211, 8
      %s213 = smul.addr %s212, 8
      %s214 = scalar_lea.vmem %s4, %s213
      %p215 = scmp.lt.s32.totalorder %s19, 1
      %s216 = scalar_select %p215, %s19, 1
      %s217 = smul.addr %s216, 8
      %s218 = smul.addr %s217, 8
      %s219 = scalar_lea.vmem %s0, %s218
      %p220 = scmp.lt.s32.totalorder %s20, 2
      %s221 = scalar_select %p220, %s20, 2
      %s222 = smul.addr %s221, 36
      %s223 = smul.addr %s222, 4
      %s224 = scalar_lea.vmem %s3, %s223
      %p225 = scmp.lt.s32.totalorder %s19, 1
      %s226 = scalar_select %p225, %s19, 1
      %s227 = smul.addr %s226, 8
      %s228 = smul.addr %s227, 8
      %s229 = scalar_lea.vmem %s4, %s228
      %p231 = scmp.eq.s32.totalorder %s20, 0
      // Predicated region
      $region37: #{dilated_conv3d_block.1} parent=35 // pred_check
        %p232 = pneg %p231
      $region38: #{dilated_conv3d_block.1} parent=35 // pred_check_branch
        %234 = sbr.rel (%p232) target = $region40
      $region39: #{dilated_conv3d_block.1} parent=35 // pred_region
        %vm235 = vcmask 781312
        %236 = vst.msk [vmem:[#allocation2] sm:$0xf] %vm235, 0
        %vm237 = vcmask 779264
        %238 = vst.msk [vmem:[#allocation2 + $0x4] sm:$0x3] %vm237, 0
        %239 = vst.msk [vmem:[#allocation2 + $0x8] sm:$0xf] %vm235, 0
        %240 = vst.msk [vmem:[#allocation2 + $0xc] sm:$0x3] %vm237, 0
        %s241 = scalar_lea.vmem [#allocation2], 80
        %242 = vst.msk [vmem:[%s241] sm:$0xf] %vm235, 0
        %243 = vst.msk [vmem:[%s241 + $0x4] sm:$0x3] %vm237, 0
        %244 = vst.msk [vmem:[%s241 + $0x8] sm:$0xf] %vm235, 0
        %245 = vst.msk [vmem:[%s241 + $0xc] sm:$0x3] %vm237, 0
        %s246 = scalar_lea.vmem [#allocation2], 16
        %vm247 = vcmask 778240
        %248 = vst.msk [vmem:[%s246] sm:$0x1] %vm247, 0
        %249 = vst.msk [vmem:[%s246 + $0x8] sm:$0x1] %vm247, 0
        %250 = vst.msk [vmem:[%s246 + $0x10] sm:$0x1] %vm247, 0
        %251 = vst.msk [vmem:[%s246 + $0x18] sm:$0x1] %vm247, 0
        %252 = vst.msk [vmem:[%s246 + $0x20] sm:$0x1] %vm247, 0
        %253 = vst.msk [vmem:[%s246 + $0x28] sm:$0x1] %vm247, 0
        %254 = vst.msk [vmem:[%s246 + $0x30] sm:$0x1] %vm247, 0
        %255 = vst.msk [vmem:[%s246 + $0x38] sm:$0x1] %vm247, 0
        %vm256 = vcmask 779265
        %257 = vst.msk [vmem:[%s246 + $0x4] sm:$0x2] %vm256, 0
        %258 = vst.msk [vmem:[%s246 + $0xc] sm:$0x2] %vm256, 0
        %259 = vst.msk [vmem:[%s246 + $0x14] sm:$0x2] %vm256, 0
        %260 = vst.msk [vmem:[%s246 + $0x1c] sm:$0x2] %vm256, 0
        %261 = vst.msk [vmem:[%s246 + $0x24] sm:$0x2] %vm256, 0
        %262 = vst.msk [vmem:[%s246 + $0x2c] sm:$0x2] %vm256, 0
        %263 = vst.msk [vmem:[%s246 + $0x34] sm:$0x2] %vm256, 0
        %264 = vst.msk [vmem:[%s246 + $0x3c] sm:$0x2] %vm256, 0
        %vm265 = vcmask 125953
        %266 = vst.msk [vmem:[%s246] sm:$0xe] %vm265, 0
        %vm267 = vcmask 122880
        %268 = vst.msk [vmem:[%s246 + $0x4] sm:$0x1] %vm267, 0
        %269 = vst.msk [vmem:[%s246 + $0x8] sm:$0xe] %vm265, 0
        %270 = vst.msk [vmem:[%s246 + $0xc] sm:$0x1] %vm267, 0
        %271 = vst.msk [vmem:[%s246 + $0x10] sm:$0xe] %vm265, 0
        %272 = vst.msk [vmem:[%s246 + $0x14] sm:$0x1] %vm267, 0
        %273 = vst.msk [vmem:[%s246 + $0x18] sm:$0xe] %vm265, 0
        %274 = vst.msk [vmem:[%s246 + $0x1c] sm:$0x1] %vm267, 0
        %275 = vst.msk [vmem:[%s246 + $0x20] sm:$0xe] %vm265, 0
        %276 = vst.msk [vmem:[%s246 + $0x24] sm:$0x1] %vm267, 0
        %277 = vst.msk [vmem:[%s246 + $0x28] sm:$0xe] %vm265, 0
        %278 = vst.msk [vmem:[%s246 + $0x2c] sm:$0x1] %vm267, 0
        %279 = vst.msk [vmem:[%s246 + $0x30] sm:$0xe] %vm265, 0
        %280 = vst.msk [vmem:[%s246 + $0x34] sm:$0x1] %vm267, 0
        %281 = vst.msk [vmem:[%s246 + $0x38] sm:$0xe] %vm265, 0
        %282 = vst.msk [vmem:[%s246 + $0x3c] sm:$0x1] %vm267, 0
        %vm283 = vcmask 781953
        %284 = vst.msk [vmem:[%s246] sm:$0xe] %vm283, 0
        %vm285 = vcmask 778880
        %286 = vst.msk [vmem:[%s246 + $0x4] sm:$0x1] %vm285, 0
        %287 = vst.msk [vmem:[%s246 + $0x8] sm:$0xe] %vm283, 0
        %288 = vst.msk [vmem:[%s246 + $0xc] sm:$0x1] %vm285, 0
        %289 = vst.msk [vmem:[%s246 + $0x10] sm:$0xe] %vm283, 0
        %290 = vst.msk [vmem:[%s246 + $0x14] sm:$0x1] %vm285, 0
        %291 = vst.msk [vmem:[%s246 + $0x18] sm:$0xe] %vm283, 0
        %292 = vst.msk [vmem:[%s246 + $0x1c] sm:$0x1] %vm285, 0
        %293 = vst.msk [vmem:[%s246 + $0x20] sm:$0xe] %vm283, 0
        %294 = vst.msk [vmem:[%s246 + $0x24] sm:$0x1] %vm285, 0
        %295 = vst.msk [vmem:[%s246 + $0x28] sm:$0xe] %vm283, 0
        %296 = vst.msk [vmem:[%s246 + $0x2c] sm:$0x1] %vm285, 0
        %297 = vst.msk [vmem:[%s246 + $0x30] sm:$0xe] %vm283, 0
        %298 = vst.msk [vmem:[%s246 + $0x34] sm:$0x1] %vm285, 0
        %299 = vst.msk [vmem:[%s246 + $0x38] sm:$0xe] %vm283, 0
        %300 = vst.msk [vmem:[%s246 + $0x3c] sm:$0x1] %vm285, 0
        %v301 = vld [vmem:[%s219] sm:$0xff]
        %v302 = vld [vmem:[%s219 + $0x8] sm:$0xff]
        %v303 = vld [vmem:[%s219 + $0x10] sm:$0xff]
        %v304 = vld [vmem:[%s219 + $0x18] sm:$0xff]
        %v305 = vld [vmem:[%s219 + $0x20] sm:$0xff]
        %v306 = vld [vmem:[%s219 + $0x28] sm:$0xff]
        %v307 = vld [vmem:[%s219 + $0x30] sm:$0xff]
        %v308 = vld [vmem:[%s219 + $0x38] sm:$0xff]
        %v309 = vld [vmem:[%s1] sm:$0x1]
        %v311 = vperm.slane %v309, 0
        %v313 = vmul.f32 %v301, %v311
        %v314 = vmul.f32 %v302, %v311
        %v315 = vmul.f32 %v303, %v311
        %v316 = vmul.f32 %v304, %v311
        %v317 = vmul.f32 %v305, %v311
        %v318 = vmul.f32 %v306, %v311
        %v319 = vmul.f32 %v307, %v311
        %v320 = vmul.f32 %v308, %v311
        %v321 = vld [vmem:[%s2] sm:$0x1]
        %v323 = vperm.slane %v321, 0
        %v325 = vadd.f32 %v313, %v323
        %v326 = vadd.f32 %v314, %v323
        %v327 = vadd.f32 %v315, %v323
        %v328 = vadd.f32 %v316, %v323
        %v329 = vadd.f32 %v317, %v323
        %v330 = vadd.f32 %v318, %v323
        %v331 = vadd.f32 %v319, %v323
        %v332 = vadd.f32 %v320, %v323
        %v333 = vmax.f32 %v325, 0.0
        %v334 = vmax.f32 %v326, 0.0
        %v335 = vmax.f32 %v327, 0.0
        %v336 = vmax.f32 %v328, 0.0
        %v337 = vmax.f32 %v329, 0.0
        %v338 = vmax.f32 %v330, 0.0
        %v339 = vmax.f32 %v331, 0.0
        %v340 = vmax.f32 %v332, 0.0
        %v341 = vpack.c.bf16 %v333, %v333
        %v342 = vpack.c.bf16 %v334, %v334
        %v343 = vpack.c.bf16 %v335, %v335
        %v344 = vpack.c.bf16 %v336, %v336
        %v345 = vpack.c.bf16 %v337, %v337
        %v346 = vpack.c.bf16 %v338, %v338
        %v347 = vpack.c.bf16 %v339, %v339
        %v348 = vpack.c.bf16 %v340, %v340
        %v357 = vrot.slane %v341, 7
        %v358 = vrot.slane %v357, 4
        %v359 = vrot.slane %v342, 7
        %v360 = vrot.slane %v359, 4
        %v361 = vrot.slane %v343, 7
        %v362 = vrot.slane %v361, 4
        %v363 = vrot.slane %v344, 7
        %v364 = vrot.slane %v363, 4
        %v365 = vrot.slane %v345, 7
        %v366 = vrot.slane %v365, 4
        %v367 = vrot.slane %v346, 7
        %v368 = vrot.slane %v367, 4
        %v369 = vrot.slane %v347, 7
        %v370 = vrot.slane %v369, 4
        %v371 = vrot.slane %v348, 7
        %v372 = vrot.slane %v371, 4
        %373 = vrot.lane.b32.xlu0 %v357, 16
        %v374 = vpop.permute.xlu0 %373
        %375 = vrot.lane.b32.xlu0 %v358, 16
        %v376 = vpop.permute.xlu0 %375
        %377 = vrot.lane.b32.xlu0 %v359, 16
        %v378 = vpop.permute.xlu0 %377
        %379 = vrot.lane.b32.xlu0 %v360, 16
        %v380 = vpop.permute.xlu0 %379
        %381 = vrot.lane.b32.xlu0 %v361, 16
        %v382 = vpop.permute.xlu0 %381
        %383 = vrot.lane.b32.xlu0 %v362, 16
        %v384 = vpop.permute.xlu0 %383
        %385 = vrot.lane.b32.xlu0 %v363, 16
        %v386 = vpop.permute.xlu0 %385
        %387 = vrot.lane.b32.xlu0 %v364, 16
        %v388 = vpop.permute.xlu0 %387
        %389 = vrot.lane.b32.xlu0 %v365, 16
        %v390 = vpop.permute.xlu0 %389
        %391 = vrot.lane.b32.xlu0 %v366, 16
        %v392 = vpop.permute.xlu0 %391
        %393 = vrot.lane.b32.xlu0 %v367, 16
        %v394 = vpop.permute.xlu0 %393
        %395 = vrot.lane.b32.xlu0 %v368, 16
        %v396 = vpop.permute.xlu0 %395
        %397 = vrot.lane.b32.xlu0 %v369, 16
        %v398 = vpop.permute.xlu0 %397
        %399 = vrot.lane.b32.xlu0 %v370, 16
        %v400 = vpop.permute.xlu0 %399
        %401 = vrot.lane.b32.xlu0 %v371, 16
        %v402 = vpop.permute.xlu0 %401
        %403 = vrot.lane.b32.xlu0 %v372, 16
        %v404 = vpop.permute.xlu0 %403
        %vm421 = vcmask 650369
        %422 = vst.msk [vmem:[%s246] sm:$0xe] %vm421, %v374
        %vm423 = vcmask 647296
        %424 = vst.msk [vmem:[%s246 + $0x4] sm:$0x1] %vm423, %v376
        %425 = vst.msk [vmem:[%s246 + $0x8] sm:$0xe] %vm421, %v378
        %426 = vst.msk [vmem:[%s246 + $0xc] sm:$0x1] %vm423, %v380
        %427 = vst.msk [vmem:[%s246 + $0x10] sm:$0xe] %vm421, %v382
        %428 = vst.msk [vmem:[%s246 + $0x14] sm:$0x1] %vm423, %v384
        %429 = vst.msk [vmem:[%s246 + $0x18] sm:$0xe] %vm421, %v386
        %430 = vst.msk [vmem:[%s246 + $0x1c] sm:$0x1] %vm423, %v388
        %431 = vst.msk [vmem:[%s246 + $0x20] sm:$0xe] %vm421, %v390
        %432 = vst.msk [vmem:[%s246 + $0x24] sm:$0x1] %vm423, %v392
        %433 = vst.msk [vmem:[%s246 + $0x28] sm:$0xe] %vm421, %v394
        %434 = vst.msk [vmem:[%s246 + $0x2c] sm:$0x1] %vm423, %v396
        %435 = vst.msk [vmem:[%s246 + $0x30] sm:$0xe] %vm421, %v398
        %436 = vst.msk [vmem:[%s246 + $0x34] sm:$0x1] %vm423, %v400
        %437 = vst.msk [vmem:[%s246 + $0x38] sm:$0xe] %vm421, %v402
        %438 = vst.msk [vmem:[%s246 + $0x3c] sm:$0x1] %vm423, %v404
      $region40: #{dilated_conv3d_block.1} parent=35 // pred_fallthru
        _
      %s439 = smul.u32 %s20, 2
      %s440 = smul.u32 %s439, 2
      %s441 = smul.addr %s440, 4
      %s442 = scalar_lea.vmem [#allocation2], %s441
      %v443 = vld [vmem:[%s442] sm:$0xf]
      %v444 = vld [vmem:[%s442 + $0x8] sm:$0xf]
      %v445 = vld [vmem:[%s442 + $0x10] sm:$0xf]
      %v446 = vld [vmem:[%s442 + $0x18] sm:$0xf]
      %v447 = vld [vmem:[%s442 + $0x20] sm:$0xf]
      %v448 = vld [vmem:[%s442 + $0x28] sm:$0xf]
      %v449 = vld [vmem:[%s442 + $0x30] sm:$0xf]
      %v450 = vld [vmem:[%s442 + $0x38] sm:$0xf]
      %v451 = vld [vmem:[%s224] sm:$0xf]
      %v452 = vld [vmem:[%s224 + $0x4] sm:$0xf]
      %v453 = vld [vmem:[%s224 + $0x8] sm:$0xf]
      %v454 = vld [vmem:[%s224 + $0xc] sm:$0xf]
      %v455 = vld [vmem:[%s224 + $0x10] sm:$0xf]
      %v456 = vld [vmem:[%s224 + $0x14] sm:$0xf]
      %v457 = vld [vmem:[%s224 + $0x18] sm:$0xf]
      %v458 = vld [vmem:[%s224 + $0x1c] sm:$0xf]
      %v459 = vld [vmem:[%s224 + $0x20] sm:$0xf]
      %v460 = vld [vmem:[%s224 + $0x24] sm:$0xf]
      %v461 = vld [vmem:[%s224 + $0x28] sm:$0xf]
      %v462 = vld [vmem:[%s224 + $0x2c] sm:$0xf]
      %v463 = vld [vmem:[%s442] sm:$0xe]
      %v464 = vld [vmem:[%s442 + $0x4] sm:$0x1]
      %v465 = vld [vmem:[%s442 + $0x8] sm:$0xe]
      %v466 = vld [vmem:[%s442 + $0xc] sm:$0x1]
      %v467 = vld [vmem:[%s442 + $0x10] sm:$0xe]
      %v468 = vld [vmem:[%s442 + $0x14] sm:$0x1]
      %v469 = vld [vmem:[%s442 + $0x18] sm:$0xe]
      %v470 = vld [vmem:[%s442 + $0x1c] sm:$0x1]
      %v471 = vld [vmem:[%s442 + $0x20] sm:$0xe]
      %v472 = vld [vmem:[%s442 + $0x24] sm:$0x1]
      %v473 = vld [vmem:[%s442 + $0x28] sm:$0xe]
      %v474 = vld [vmem:[%s442 + $0x2c] sm:$0x1]
      %v475 = vld [vmem:[%s442 + $0x30] sm:$0xe]
      %v476 = vld [vmem:[%s442 + $0x34] sm:$0x1]
      %v477 = vld [vmem:[%s442 + $0x38] sm:$0xe]
      %v478 = vld [vmem:[%s442 + $0x3c] sm:$0x1]
      %vm495 = vcmask 1042432
      %vm496 = vcmask 1046532
      %vm497 = vmor %vm495, %vm496
      %v498 = vrot.slane %v463, 5
      %v499 = vrot.slane %v498, 4
      %v500 = vrot.slane %v464, 5
      %v501 = vsel %vm497, %v499, %v500
      %v502 = vrot.slane %v465, 5
      %v503 = vrot.slane %v502, 4
      %v504 = vrot.slane %v466, 5
      %v505 = vsel %vm497, %v503, %v504
      %v506 = vrot.slane %v467, 5
      %v507 = vrot.slane %v506, 4
      %v508 = vrot.slane %v468, 5
      %v509 = vsel %vm497, %v507, %v508
      %v510 = vrot.slane %v469, 5
      %v511 = vrot.slane %v510, 4
      %v512 = vrot.slane %v470, 5
      %v513 = vsel %vm497, %v511, %v512
      %v514 = vrot.slane %v471, 5
      %v515 = vrot.slane %v514, 4
      %v516 = vrot.slane %v472, 5
      %v517 = vsel %vm497, %v515, %v516
      %v518 = vrot.slane %v473, 5
      %v519 = vrot.slane %v518, 4
      %v520 = vrot.slane %v474, 5
      %v521 = vsel %vm497, %v519, %v520
      %v522 = vrot.slane %v475, 5
      %v523 = vrot.slane %v522, 4
      %v524 = vrot.slane %v476, 5
      %v525 = vsel %vm497, %v523, %v524
      %v526 = vrot.slane %v477, 5
      %v527 = vrot.slane %v526, 4
      %v528 = vrot.slane %v478, 5
      %v529 = vsel %vm497, %v527, %v528
      %s530 = scalar_lea.vmem %s224, 48
      %v531 = vld [vmem:[%s530] sm:$0xf]
      %v532 = vld [vmem:[%s530 + $0x4] sm:$0xf]
      %v533 = vld [vmem:[%s530 + $0x8] sm:$0xf]
      %v534 = vld [vmem:[%s530 + $0xc] sm:$0xf]
      %v535 = vld [vmem:[%s530 + $0x10] sm:$0xf]
      %v536 = vld [vmem:[%s530 + $0x14] sm:$0xf]
      %v537 = vld [vmem:[%s530 + $0x18] sm:$0xf]
      %v538 = vld [vmem:[%s530 + $0x1c] sm:$0xf]
      %v539 = vld [vmem:[%s530 + $0x20] sm:$0xf]
      %v540 = vld [vmem:[%s530 + $0x24] sm:$0xf]
      %v541 = vld [vmem:[%s530 + $0x28] sm:$0xf]
      %v542 = vld [vmem:[%s530 + $0x2c] sm:$0xf]
      %v543 = vunpack.c.l.b16 %v501
      %v544 = vunpack.c.l.b16 %v505
      %v545 = vunpack.c.l.b16 %v509
      %v546 = vunpack.c.l.b16 %v513
      %v547 = vunpack.c.l.b16 %v517
      %v548 = vunpack.c.l.b16 %v521
      %v549 = vunpack.c.l.b16 %v525
      %v550 = vunpack.c.l.b16 %v529
      %v551 = vpack.c.b16 %v544, %v543
      %v552 = vpack.c.b16 %v546, %v545
      %v553 = vpack.c.b16 %v548, %v547
      %v554 = vpack.c.b16 %v550, %v549
      %v567 = vunpack.c.l.b16 %v531
      %v568 = vunpack.c.l.b16 %v532
      %v569 = vunpack.c.l.b16 %v533
      %v570 = vunpack.c.l.b16 %v534
      %v571 = vunpack.c.l.b16 %v535
      %v572 = vunpack.c.l.b16 %v536
      %v573 = vunpack.c.l.b16 %v537
      %v574 = vunpack.c.l.b16 %v538
      %v575 = vunpack.c.l.b16 %v539
      %v576 = vunpack.c.l.b16 %v540
      %v577 = vunpack.c.l.b16 %v541
      %v578 = vunpack.c.l.b16 %v542
      %v579 = vpack.c.b16 %v568, %v567
      %v580 = vpack.c.b16 %v570, %v569
      %v581 = vpack.c.b16 %v572, %v571
      %v582 = vpack.c.b16 %v574, %v573
      %v583 = vpack.c.b16 %v576, %v575
      %v584 = vpack.c.b16 %v578, %v577
      %vm591 = vcmask 785408
      %v593 = vsel %vm591, %v551, 0
      %v596 = vsel %vm591, %v552, 0
      %v599 = vsel %vm591, %v553, 0
      %v602 = vsel %vm591, %v554, 0
      %604 = vmatpush.bf16.msra.mxu0 0
      %605 = vmatpush.bf16.msra.mxu0 0
      %606 = vmatpush.bf16.msra.mxu0 %v584
      %607 = vmatpush.bf16.msra.mxu0 %v583
      %608 = vmatpush.bf16.msra.mxu0 %v582
      %609 = vmatpush.bf16.msra.mxu0 %v581
      %610 = vmatpush.bf16.msra.mxu0 %v580
      %611 = vmatpush.bf16.msra.mxu0 %v579
      %612 = vmatmul.bf16.gmra.mxu0 %v593
      %v613 = vpop.f32.mrf.mxu0
      %v614 = vadd.f32 0.0, %v613
      %v615 = vpop.f32.mrf.mxu0
      %v616 = vadd.f32 0.0, %v615
      %617 = vmatmul.bf16.gmra.mxu0 %v596
      %v618 = vpop.f32.mrf.mxu0
      %v619 = vadd.f32 0.0, %v618
      %v620 = vpop.f32.mrf.mxu0
      %v621 = vadd.f32 0.0, %v620
      %622 = vmatmul.bf16.gmra.mxu0 %v599
      %v623 = vpop.f32.mrf.mxu0
      %v624 = vadd.f32 0.0, %v623
      %v625 = vpop.f32.mrf.mxu0
      %v626 = vadd.f32 0.0, %v625
      %627 = vmatmul.bf16.gmra.mxu0 %v602
      %v628 = vpop.f32.mrf.mxu0
      %v629 = vadd.f32 0.0, %v628
      %v630 = vpop.f32.mrf.mxu0
      %v631 = vadd.f32 0.0, %v630
      %632 = vdwg.mxu0
      %v641 = vunpack.c.l.b16 %v443
      %v642 = vunpack.c.l.b16 %v444
      %v643 = vunpack.c.l.b16 %v445
      %v644 = vunpack.c.l.b16 %v446
      %v645 = vunpack.c.l.b16 %v447
      %v646 = vunpack.c.l.b16 %v448
      %v647 = vunpack.c.l.b16 %v449
      %v648 = vunpack.c.l.b16 %v450
      %v649 = vpack.c.b16 %v642, %v641
      %v650 = vpack.c.b16 %v644, %v643
      %v651 = vpack.c.b16 %v646, %v645
      %v652 = vpack.c.b16 %v648, %v647
      %v665 = vunpack.c.l.b16 %v451
      %v666 = vunpack.c.l.b16 %v452
      %v667 = vunpack.c.l.b16 %v453
      %v668 = vunpack.c.l.b16 %v454
      %v669 = vunpack.c.l.b16 %v455
      %v670 = vunpack.c.l.b16 %v456
      %v671 = vunpack.c.l.b16 %v457
      %v672 = vunpack.c.l.b16 %v458
      %v673 = vunpack.c.l.b16 %v459
      %v674 = vunpack.c.l.b16 %v460
      %v675 = vunpack.c.l.b16 %v461
      %v676 = vunpack.c.l.b16 %v462
      %v677 = vpack.c.b16 %v666, %v665
      %v678 = vpack.c.b16 %v668, %v667
      %v679 = vpack.c.b16 %v670, %v669
      %v680 = vpack.c.b16 %v672, %v671
      %v681 = vpack.c.b16 %v674, %v673
      %v682 = vpack.c.b16 %v676, %v675
      %v690 = vsel %vm591, %v649, 0
      %v693 = vsel %vm591, %v650, 0
      %v696 = vsel %vm591, %v651, 0
      %v699 = vsel %vm591, %v652, 0
      %701 = vmatpush.bf16.msra.mxu0 0
      %702 = vmatpush.bf16.msra.mxu0 0
      %703 = vmatpush.bf16.msra.mxu0 %v682
      %704 = vmatpush.bf16.msra.mxu0 %v681
      %705 = vmatpush.bf16.msra.mxu0 %v680
      %706 = vmatpush.bf16.msra.mxu0 %v679
      %707 = vmatpush.bf16.msra.mxu0 %v678
      %708 = vmatpush.bf16.msra.mxu0 %v677
      %709 = vmatmul.bf16.gmra.mxu0 %v690
      %v710 = vpop.f32.mrf.mxu0
      %v711 = vadd.f32 %v614, %v710
      %v712 = vpop.f32.mrf.mxu0
      %v713 = vadd.f32 %v616, %v712
      %714 = vmatmul.bf16.gmra.mxu0 %v693
      %v715 = vpop.f32.mrf.mxu0
      %v716 = vadd.f32 %v619, %v715
      %v717 = vpop.f32.mrf.mxu0
      %v718 = vadd.f32 %v621, %v717
      %719 = vmatmul.bf16.gmra.mxu0 %v696
      %v720 = vpop.f32.mrf.mxu0
      %v721 = vadd.f32 %v624, %v720
      %v722 = vpop.f32.mrf.mxu0
      %v723 = vadd.f32 %v626, %v722
      %724 = vmatmul.bf16.gmra.mxu0 %v699
      %v725 = vpop.f32.mrf.mxu0
      %v726 = vadd.f32 %v629, %v725
      %v727 = vpop.f32.mrf.mxu0
      %v728 = vadd.f32 %v631, %v727
      %729 = vdwg.mxu0
      %v730 = vld [vmem:[%s442] sm:$0xc]
      %v731 = vld [vmem:[%s442 + $0x4] sm:$0x3]
      %v732 = vld [vmem:[%s442 + $0x8] sm:$0xc]
      %v733 = vld [vmem:[%s442 + $0xc] sm:$0x3]
      %v734 = vld [vmem:[%s442 + $0x10] sm:$0xc]
      %v735 = vld [vmem:[%s442 + $0x14] sm:$0x3]
      %v736 = vld [vmem:[%s442 + $0x18] sm:$0xc]
      %v737 = vld [vmem:[%s442 + $0x1c] sm:$0x3]
      %v738 = vld [vmem:[%s442 + $0x20] sm:$0xc]
      %v739 = vld [vmem:[%s442 + $0x24] sm:$0x3]
      %v740 = vld [vmem:[%s442 + $0x28] sm:$0xc]
      %v741 = vld [vmem:[%s442 + $0x2c] sm:$0x3]
      %v742 = vld [vmem:[%s442 + $0x30] sm:$0xc]
      %v743 = vld [vmem:[%s442 + $0x34] sm:$0x3]
      %v744 = vld [vmem:[%s442 + $0x38] sm:$0xc]
      %v745 = vld [vmem:[%s442 + $0x3c] sm:$0x3]
      %vm762 = vcmask 1041408
      %vm763 = vcmask 1045508
      %vm764 = vmor %vm762, %vm763
      %v765 = vrot.slane %v730, 6
      %v766 = vrot.slane %v765, 4
      %v767 = vrot.slane %v731, 6
      %v768 = vsel %vm764, %v766, %v767
      %v769 = vrot.slane %v732, 6
      %v770 = vrot.slane %v769, 4
      %v771 = vrot.slane %v733, 6
      %v772 = vsel %vm764, %v770, %v771
      %v773 = vrot.slane %v734, 6
      %v774 = vrot.slane %v773, 4
      %v775 = vrot.slane %v735, 6
      %v776 = vsel %vm764, %v774, %v775
      %v777 = vrot.slane %v736, 6
      %v778 = vrot.slane %v777, 4
      %v779 = vrot.slane %v737, 6
      %v780 = vsel %vm764, %v778, %v779
      %v781 = vrot.slane %v738, 6
      %v782 = vrot.slane %v781, 4
      %v783 = vrot.slane %v739, 6
      %v784 = vsel %vm764, %v782, %v783
      %v785 = vrot.slane %v740, 6
      %v786 = vrot.slane %v785, 4
      %v787 = vrot.slane %v741, 6
      %v788 = vsel %vm764, %v786, %v787
      %v789 = vrot.slane %v742, 6
      %v790 = vrot.slane %v789, 4
      %v791 = vrot.slane %v743, 6
      %v792 = vsel %vm764, %v790, %v791
      %v793 = vrot.slane %v744, 6
      %v794 = vrot.slane %v793, 4
      %v795 = vrot.slane %v745, 6
      %v796 = vsel %vm764, %v794, %v795
      %s797 = scalar_lea.vmem %s224, 96
      %v798 = vld [vmem:[%s797] sm:$0xf]
      %v799 = vld [vmem:[%s797 + $0x4] sm:$0xf]
      %v800 = vld [vmem:[%s797 + $0x8] sm:$0xf]
      %v801 = vld [vmem:[%s797 + $0xc] sm:$0xf]
      %v802 = vld [vmem:[%s797 + $0x10] sm:$0xf]
      %v803 = vld [vmem:[%s797 + $0x14] sm:$0xf]
      %v804 = vld [vmem:[%s797 + $0x18] sm:$0xf]
      %v805 = vld [vmem:[%s797 + $0x1c] sm:$0xf]
      %v806 = vld [vmem:[%s797 + $0x20] sm:$0xf]
      %v807 = vld [vmem:[%s797 + $0x24] sm:$0xf]
      %v808 = vld [vmem:[%s797 + $0x28] sm:$0xf]
      %v809 = vld [vmem:[%s797 + $0x2c] sm:$0xf]
      %v810 = vunpack.c.l.b16 %v768
      %v811 = vunpack.c.l.b16 %v772
      %v812 = vunpack.c.l.b16 %v776
      %v813 = vunpack.c.l.b16 %v780
      %v814 = vunpack.c.l.b16 %v784
      %v815 = vunpack.c.l.b16 %v788
      %v816 = vunpack.c.l.b16 %v792
      %v817 = vunpack.c.l.b16 %v796
      %v818 = vpack.c.b16 %v811, %v810
      %v819 = vpack.c.b16 %v813, %v812
      %v820 = vpack.c.b16 %v815, %v814
      %v821 = vpack.c.b16 %v817, %v816
      %v834 = vunpack.c.l.b16 %v798
      %v835 = vunpack.c.l.b16 %v799
      %v836 = vunpack.c.l.b16 %v800
      %v837 = vunpack.c.l.b16 %v801
      %v838 = vunpack.c.l.b16 %v802
      %v839 = vunpack.c.l.b16 %v803
      %v840 = vunpack.c.l.b16 %v804
      %v841 = vunpack.c.l.b16 %v805
      %v842 = vunpack.c.l.b16 %v806
      %v843 = vunpack.c.l.b16 %v807
      %v844 = vunpack.c.l.b16 %v808
      %v845 = vunpack.c.l.b16 %v809
      %v846 = vpack.c.b16 %v835, %v834
      %v847 = vpack.c.b16 %v837, %v836
      %v848 = vpack.c.b16 %v839, %v838
      %v849 = vpack.c.b16 %v841, %v840
      %v850 = vpack.c.b16 %v843, %v842
      %v851 = vpack.c.b16 %v845, %v844
      %v859 = vsel %vm591, %v818, 0
      %v862 = vsel %vm591, %v819, 0
      %v865 = vsel %vm591, %v820, 0
      %v868 = vsel %vm591, %v821, 0
      %870 = vmatpush.bf16.msra.mxu0 0
      %871 = vmatpush.bf16.msra.mxu0 0
      %872 = vmatpush.bf16.msra.mxu0 %v851
      %873 = vmatpush.bf16.msra.mxu0 %v850
      %874 = vmatpush.bf16.msra.mxu0 %v849
      %875 = vmatpush.bf16.msra.mxu0 %v848
      %876 = vmatpush.bf16.msra.mxu0 %v847
      %877 = vmatpush.bf16.msra.mxu0 %v846
      %878 = vmatmul.bf16.gmra.mxu0 %v859
      %v879 = vpop.f32.mrf.mxu0
      %v880 = vadd.f32 0.0, %v879
      %v881 = vpop.f32.mrf.mxu0
      %v882 = vadd.f32 0.0, %v881
      %883 = vmatmul.bf16.gmra.mxu0 %v862
      %v884 = vpop.f32.mrf.mxu0
      %v885 = vadd.f32 0.0, %v884
      %v886 = vpop.f32.mrf.mxu0
      %v887 = vadd.f32 0.0, %v886
      %888 = vmatmul.bf16.gmra.mxu0 %v865
      %v889 = vpop.f32.mrf.mxu0
      %v890 = vadd.f32 0.0, %v889
      %v891 = vpop.f32.mrf.mxu0
      %v892 = vadd.f32 0.0, %v891
      %893 = vmatmul.bf16.gmra.mxu0 %v868
      %v894 = vpop.f32.mrf.mxu0
      %v895 = vadd.f32 0.0, %v894
      %v896 = vpop.f32.mrf.mxu0
      %v897 = vadd.f32 0.0, %v896
      %898 = vdwg.mxu0
      %v899 = vadd.f32 %v711, %v880
      %v900 = vadd.f32 %v713, %v882
      %v901 = vadd.f32 %v716, %v885
      %v902 = vadd.f32 %v718, %v887
      %v903 = vadd.f32 %v721, %v890
      %v904 = vadd.f32 %v723, %v892
      %v905 = vadd.f32 %v726, %v895
      %v906 = vadd.f32 %v728, %v897
      // Predicated region
      $region41: #{dilated_conv3d_block.1} parent=35 // pred_check
        %p907 = pneg %p231
      $region42: #{dilated_conv3d_block.1} parent=35 // pred_check_branch
        %909 = sbr.rel (%p907) target = $region44
      $region43: #{dilated_conv3d_block.1} parent=35 // pred_region
        %910 = vst [vmem:[%s229] sm:$0xff] %v899
        %911 = vst [vmem:[%s229 + $0x8] sm:$0xff] %v900
        %912 = vst [vmem:[%s229 + $0x10] sm:$0xff] %v901
        %913 = vst [vmem:[%s229 + $0x18] sm:$0xff] %v902
        %914 = vst [vmem:[%s229 + $0x20] sm:$0xff] %v903
        %915 = vst [vmem:[%s229 + $0x28] sm:$0xff] %v904
        %916 = vst [vmem:[%s229 + $0x30] sm:$0xff] %v905
        %917 = vst [vmem:[%s229 + $0x38] sm:$0xff] %v906
      $region44: #{dilated_conv3d_block.1} parent=35 // pred_fallthru
        _
      %p918 = scmp.gt.s32.totalorder %s20, 0
      // Predicated region
      $region45: #{dilated_conv3d_block.1} parent=35 // pred_check
        %p919 = pneg %p918
      $region46: #{dilated_conv3d_block.1} parent=35 // pred_check_branch
        %921 = sbr.rel (%p919) target = $region48
      $region47: #{dilated_conv3d_block.1} parent=35 // pred_region
        %v922 = vld [vmem:[%s229] sm:$0xff]
        %v923 = vld [vmem:[%s229 + $0x8] sm:$0xff]
        %v924 = vld [vmem:[%s229 + $0x10] sm:$0xff]
        %v925 = vld [vmem:[%s229 + $0x18] sm:$0xff]
        %v926 = vld [vmem:[%s229 + $0x20] sm:$0xff]
        %v927 = vld [vmem:[%s229 + $0x28] sm:$0xff]
        %v928 = vld [vmem:[%s229 + $0x30] sm:$0xff]
        %v929 = vld [vmem:[%s229 + $0x38] sm:$0xff]
        %v930 = vadd.f32 %v922, %v899
        %v931 = vadd.f32 %v923, %v900
        %v932 = vadd.f32 %v924, %v901
        %v933 = vadd.f32 %v925, %v902
        %v934 = vadd.f32 %v926, %v903
        %v935 = vadd.f32 %v927, %v904
        %v936 = vadd.f32 %v928, %v905
        %v937 = vadd.f32 %v929, %v906
        %938 = vst [vmem:[%s229] sm:$0xff] %v930
        %939 = vst [vmem:[%s229 + $0x8] sm:$0xff] %v931
        %940 = vst [vmem:[%s229 + $0x10] sm:$0xff] %v932
        %941 = vst [vmem:[%s229 + $0x18] sm:$0xff] %v933
        %942 = vst [vmem:[%s229 + $0x20] sm:$0xff] %v934
        %943 = vst [vmem:[%s229 + $0x28] sm:$0xff] %v935
        %944 = vst [vmem:[%s229 + $0x30] sm:$0xff] %v936
        %945 = vst [vmem:[%s229 + $0x38] sm:$0xff] %v937
      $region48: #{dilated_conv3d_block.1} parent=35 // pred_fallthru
        _
      %p946 = scmp.lt.s32.totalorder %s19, 1
      %s947 = scalar_select %p946, %s19, 1
      %s948 = smul.addr %s947, 8
      %s949 = smul.addr %s948, 8
      %s950 = scalar_lea.vmem %s4, %s949
      // Predicated region
      $region49: #{dilated_conv3d_block.1} parent=35 // pred_check
        %p951 = pneg %p139
      $region50: #{dilated_conv3d_block.1} parent=35 // pred_check_branch
        %953 = sbr.rel (%p951) target = $region52
      $region51: #{dilated_conv3d_block.1} parent=35 // pred_region
        _
      $region52: #{dilated_conv3d_block.1} parent=35 // pred_fallthru
        _
    $region36: #{dilated_conv3d_block.1} parent=5 // pred_fallthru
      _
    %p954 = scmp.le.s32.totalorder 2, %s10
    // Predicated region
    $region53: #{dilated_conv3d_block.1} parent=5 // pred_check
      %p955 = pneg %p954
    $region54: #{dilated_conv3d_block.1} parent=5 // pred_check_branch
      %957 = sbr.rel (%p955) target = $region56
    $region55: #{dilated_conv3d_block.1} parent=5 // pred_region
      %s958 = ssub.s32 %s10, 2
      // Predicated region
      $region57: #{dilated_conv3d_block.1} parent=55 // pred_check
        %p959 = pneg %p145
      $region58: #{dilated_conv3d_block.1} parent=55 // pred_check_branch
        %961 = sbr.rel (%p959) target = $region60
      $region59: #{dilated_conv3d_block.1} parent=55 // pred_region
        %p962 = scmp.lt.s32.totalorder %s21, 1
        %s963 = scalar_select %p962, %s21, 1
        %s964 = smul.addr %s963, 8
        %s965 = smul.addr %s964, 8
        %s966 = scalar_lea.vmem %s4, %s965
      $region60: #{dilated_conv3d_block.1} parent=55 // pred_fallthru
        _
    $region56: #{dilated_conv3d_block.1} parent=5 // pred_fallthru
      _
  $region6: #{dilated_conv3d_block.1} parent=0 // loop_footer
    %s14 = sadd.s32 1, %s10
  $region7: #{dilated_conv3d_block.1} parent=0 // loop_footer_branch
    %9 = sbr.rel target = $region3
  $region8: #{dilated_conv3d_block.1} parent=0 // loop_exit
    _

</llo_original>
